<compile_context>
chip_gen: v7x
topology: tpu7x:2x2x1
jax: 0.10.0
libtpu: 0.0.40
codegen_flags: <defaults>
</compile_context>

<pallas_src>
import functools

import jax
import jax.numpy as jnp
from jax.experimental import pallas as pl
from jax.experimental.pallas import tpu as pltpu


def _round_up(x, m):
    return (x + m - 1) // m * m


def _head_kernel(l_ref, r_ref, w_ref, b_ref, o_ref):
    # |l_t - r_t| on the VPU (kept in the input dtype; Mosaic upcasts on v5e).
    feats = jnp.abs(l_ref[...] - r_ref[...])
    # (1, D) contracted with (TB, D) on D -> (1, TB): logits land lane-dense
    # (batch on lanes) with no transpose of the big feats tile.
    logits = jax.lax.dot_general(
        w_ref[...], feats,
        dimension_numbers=(((1,), (1,)), ((), ())),
        preferred_element_type=jnp.float32)
    # NOTE: ragged-tail invariant (see header) — each output lane depends only
    # on its own feats row; stale tail rows only affect discarded lanes >= B.
    o_ref[...] = jax.nn.sigmoid(logits + b_ref[0, 0]).astype(o_ref.dtype)


def _chip_hint():
    """(default max batch tile, TensorCores per chip) for the local TPU.

    Conservative (v5e-safe) fallback if the device kind is unrecognized.
      v5e : 16 MiB scoped-VMEM default -> 512-row tiles, 1 TC.
      v6e : 32 MiB scoped default      -> 1024-row tiles fit w/o flags, 1 TC.
      v7x : 64 MiB VMEM, 2 TC/chip     -> 1024-row tiles, grid split >= 2.
    """
    try:
        kind = jax.devices()[0].device_kind.lower()
    except Exception:
        return 512, 1
    if "v7" in kind:
        return 1024, 2
    if "v6" in kind:
        return 1024, 1
    return 512, 1


@functools.partial(jax.jit, static_argnames=("max_batch_tile", "num_tc_hint"))
def _head_impl(l_t, r_t, w, b, *, max_batch_tile, num_tc_hint):
    B, D = l_t.shape
    itemsize = jnp.dtype(l_t.dtype).itemsize
    # Tiny params: weight cast to the feature dtype (MXU-native), bias -> SMEM.
    w = jnp.asarray(w).reshape(1, D).astype(l_t.dtype)
    b = jnp.asarray(b, jnp.float32).reshape(1, 1)

    # ---- tile selection (mem-bound: biggest tile that fits scoped VMEM) ----
    max_batch_tile = max(128, int(max_batch_tile))
    if num_tc_hint >= 2 and B >= 256:
        # v7x: ensure >= 2 lane-aligned tiles so both TensorCores get work
        # under dimension_semantics=("parallel",).
        tile = min((max_batch_tile // 128) * 128,
                   _round_up(pl.cdiv(B, 2), 128))
    elif B <= max_batch_tile:
        tile = B                       # single block == full input dims (no pad needed)
    else:
        tile = (max_batch_tile // 128) * 128
    num_tiles = pl.cdiv(B, tile)
    b_pad = num_tiles * tile           # only the tiny (1, b_pad) output is padded

    cost = pl.CostEstimate(
        flops=4 * B * D,               # abs-diff + matvec (real traffic, not padded)
        transcendentals=B,             # sigmoid
        bytes_accessed=2 * B * D * itemsize + D * itemsize + 4 + B * 4,
    )

    out = pl.pallas_call(
        _head_kernel,
        out_shape=jax.ShapeDtypeStruct((1, b_pad), jnp.float32),
        grid_spec=pltpu.PrefetchScalarGridSpec(
            num_scalar_prefetch=0,
            grid=(num_tiles,),
            in_specs=[
                pl.BlockSpec((tile, D), lambda i: (i, 0)),
                pl.BlockSpec((tile, D), lambda i: (i, 0)),
                pl.BlockSpec((1, D), lambda i: (0, 0)),
                pl.BlockSpec(memory_space=pltpu.MemorySpace.SMEM),
            ],
            out_specs=pl.BlockSpec((1, tile), lambda i: (0, i)),
        ),
        compiler_params=pltpu.CompilerParams(
            dimension_semantics=("parallel",),
        ),
        cost_estimate=cost,
    )(l_t, r_t, w, b)

    # (1, b_pad) lane-dense  ->  module contract (B, 1); drop padded lanes.
    return out.reshape(b_pad, 1)[:B]


def lsae_left_right_head(l_t, r_t, w, b, *, max_batch_tile=None, num_tc_hint=None):
    """sigmoid(|l_t - r_t| @ w.T + b) as one Pallas kernel.

    l_t, r_t : (B, D) texture features (f32 or bf16; NOT cast here — bf16
               features from the producer halve this kernel's HBM traffic).
    w        : (1, D) linear-head weight (PyTorch nn.Linear layout).
    b        : scalar / (1,) / (1, 1) bias.
    returns  : (B, 1) float32 probabilities.
    """
    if max_batch_tile is None or num_tc_hint is None:
        d_tile, d_tc = _chip_hint()
        max_batch_tile = d_tile if max_batch_tile is None else max_batch_tile
        num_tc_hint = d_tc if num_tc_hint is None else num_tc_hint
    return _head_impl(l_t, r_t, w, b,
                      max_batch_tile=int(max_batch_tile),
                      num_tc_hint=int(num_tc_hint))


# --------------------------------------------------------------------------
# Deterministic stand-in for the frozen texture encoder (plain-JAX glue).
# TODO(synk): the real `trained_tex_encoder` is an external frozen network
#             with no definition in the reference; this stand-in flattens the
#             NCHW image and applies a fixed linear projection to D dims.
# --------------------------------------------------------------------------
def standin_tex_encoder(x_nchw, enc_w):
    B = x_nchw.shape[0]
    flat = x_nchw.reshape(B, -1)          # (B, C*H*W)
    return jnp.tanh(flat @ enc_w)         # (B, texture_dims)


if __name__ == "__main__":
    key = jax.random.PRNGKey(0)
    k_l, k_r, k_enc, k_w, k_b, k_l2, k_r2 = jax.random.split(key, 7)

    # Small, module-consistent shapes.
    B, C, H, W = 8, 1, 16, 16            # thermal image halves, NCHW
    texture_dims = 1024                  # module default

    l_x = jax.random.normal(k_l, (B, C, H, W), dtype=jnp.float32)
    r_x = jax.random.normal(k_r, (B, C, H, W), dtype=jnp.float32)

    # Frozen stand-in encoder parameters (deterministic).
    enc_w = jax.random.normal(k_enc, (C * H * W, texture_dims),
                              dtype=jnp.float32) * 0.05

    # Trainable head parameters: nn.Linear(texture_dims, 1)
    # (PyTorch weight layout: (out_features, in_features) = (1, D)).
    head_w = jax.random.normal(k_w, (1, texture_dims), dtype=jnp.float32) \
        * (1.0 / jnp.sqrt(texture_dims))
    head_b = jax.random.normal(k_b, (1, 1), dtype=jnp.float32) * 0.01

    # Frozen encoder on each half (glue, matches the `torch.no_grad()` calls).
    l_t = standin_tex_encoder(l_x, enc_w)
    r_t = standin_tex_encoder(r_x, enc_w)

    # 1) Pallas hot path, single-tile case: |l_t - r_t| -> Linear -> Sigmoid.
    out = lsae_left_right_head(l_t, r_t, head_w, head_b)
    out = jax.block_until_ready(out)
    ref = jax.nn.sigmoid(jnp.abs(l_t - r_t) @ head_w.T + head_b[0, 0])
    assert out.shape == (B, 1)
    assert jnp.allclose(out, ref, atol=1e-4, rtol=1e-4)

    # 2) Non-divisible batch exercising the no-pad ragged multi-tile path
    #    (forced 2-tile split as on v7x).
    B2 = 300
    l_t2 = jnp.tanh(jax.random.normal(k_l2, (B2, texture_dims), jnp.float32))
    r_t2 = jnp.tanh(jax.random.normal(k_r2, (B2, texture_dims), jnp.float32))
    out2 = lsae_left_right_head(l_t2, r_t2, head_w, head_b,
                                max_batch_tile=128, num_tc_hint=2)
    out2 = jax.block_until_ready(out2)
    ref2 = jax.nn.sigmoid(jnp.abs(l_t2 - r_t2) @ head_w.T + head_b[0, 0])
    assert out2.shape == (B2, 1)
    assert jnp.allclose(out2, ref2, atol=1e-4, rtol=1e-4)

    # 3) bf16 features straight from the (hypothetical) producer: no wrapper
    #    cast, halves the HBM read of this kernel.  Ragged bf16 tail included.
    l_bf = l_t2.astype(jnp.bfloat16)   # stands in for a bf16 encoder epilogue
    r_bf = r_t2.astype(jnp.bfloat16)
    out3 = lsae_left_right_head(l_bf, r_bf, head_w, head_b,
                                max_batch_tile=256, num_tc_hint=2)
    out3 = jax.block_until_ready(out3)
    ref3 = jax.nn.sigmoid(
        jnp.abs(l_bf.astype(jnp.float32) - r_bf.astype(jnp.float32))
        @ head_w.T + head_b[0, 0])
    assert out3.shape == (B2, 1)
    assert jnp.allclose(out3, ref3, atol=3e-2, rtol=3e-2)

    print("KERNEL_OK")
</pallas_src>

<mosaic_0001>
module attributes {stable_mosaic.version = 11 : i64} {
  func.func @_head_kernel(%arg0: i32, %arg1: memref<8x1024xf32, #tpu.memory_space<vmem>>, %arg2: memref<8x1024xf32, #tpu.memory_space<vmem>>, %arg3: memref<1x1024xf32, #tpu.memory_space<vmem>>, %arg4: memref<1x1xf32, #tpu.memory_space<smem>>, %arg5: memref<1x8xf32, #tpu.memory_space<vmem>>) attributes {dimension_semantics = [#tpu.dimension_semantics<parallel>], iteration_bounds = array<i64: 1>, scalar_prefetch = 0 : i64, scratch_operands = 0 : i64, tpu.core_type = #tpu.core_type<tc>, window_params = [{transform_indices = @transform_0, window_bounds = array<i64: 8, 1024>}, {transform_indices = @transform_1, window_bounds = array<i64: 8, 1024>}, {pipeline_mode = #tpu.pipeline_mode<synchronous>, transform_indices = @transform_2, window_bounds = array<i64: 1, 1024>}, {transform_indices = @transform_3, window_bounds = array<i64: 1, 1>}, {transform_indices = @transform_4, window_bounds = array<i64: 1, 8>}]} {
    %c0 = arith.constant 0 : index
    %c0_0 = arith.constant 0 : index
    %0 = vector.load %arg1[%c0, %c0_0] : memref<8x1024xf32, #tpu.memory_space<vmem>>, vector<8x1024xf32>
    %c0_1 = arith.constant 0 : index
    %c0_2 = arith.constant 0 : index
    %1 = vector.load %arg2[%c0_1, %c0_2] : memref<8x1024xf32, #tpu.memory_space<vmem>>, vector<8x1024xf32>
    %2 = arith.subf %0, %1 : vector<8x1024xf32>
    %3 = math.absf %2 : vector<8x1024xf32>
    %c0_3 = arith.constant 0 : index
    %c0_4 = arith.constant 0 : index
    %4 = vector.load %arg3[%c0_3, %c0_4] : memref<1x1024xf32, #tpu.memory_space<vmem>>, vector<1x1024xf32>
    %cst = arith.constant dense<0.000000e+00> : vector<1x8xf32>
    %5 = tpu.matmul %4, %3, %cst {dimension_numbers = #tpu.dot_dimension_numbers<[1], [1], [0], [0], [0, 0, 1, 0], [], []>} : vector<1x1024xf32>, vector<8x1024xf32>, vector<1x8xf32> -> vector<1x8xf32>
    %c0_5 = arith.constant 0 : index
    %c0_6 = arith.constant 0 : index
    %6 = memref.load %arg4[%c0_5, %c0_6] : memref<1x1xf32, #tpu.memory_space<smem>>
    %7 = vector.broadcast %6 : f32 to vector<1x8xf32>
    %8 = arith.addf %5, %7 : vector<1x8xf32>
    %9 = arith.negf %8 : vector<1x8xf32>
    %10 = math.exp %9 : vector<1x8xf32>
    %cst_7 = arith.constant 1.000000e+00 : f32
    %11 = vector.broadcast %cst_7 : f32 to vector<1x8xf32>
    %12 = arith.addf %11, %10 : vector<1x8xf32>
    %13 = arith.divf %11, %12 : vector<1x8xf32>
    %c0_8 = arith.constant 0 : index
    %c0_9 = arith.constant 0 : index
    %14 = vector.load %arg5[%c0_8, %c0_9] : memref<1x8xf32, #tpu.memory_space<vmem>>, vector<1x8xf32>
    tpu.vector_store %arg5[%c0_8, %c0_9], %13 {strides = array<i32>} : memref<1x8xf32, #tpu.memory_space<vmem>>, vector<1x8xf32>,
    return
  }
  func.func @transform_0(%arg0: i32) -> (i32, i32) {
    %c0_i32 = arith.constant 0 : i32
    %c0_i32_0 = arith.constant 0 : i32
    return %arg0, %c0_i32 : i32, i32
  }
  func.func @transform_1(%arg0: i32) -> (i32, i32) {
    %c0_i32 = arith.constant 0 : i32
    %c0_i32_0 = arith.constant 0 : i32
    return %arg0, %c0_i32 : i32, i32
  }
  func.func @transform_2(%arg0: i32) -> (i32, i32) {
    %c0_i32 = arith.constant 0 : i32
    %c0_i32_0 = arith.constant 0 : i32
    %c0_i32_1 = arith.constant 0 : i32
    return %c0_i32, %c0_i32_0 : i32, i32
  }
  func.func @transform_3(%arg0: i32) -> (i32, i32) {
    %c0_i32 = arith.constant 0 : i32
    %c0_i32_0 = arith.constant 0 : i32
    %c0_i32_1 = arith.constant 0 : i32
    return %c0_i32, %c0_i32_0 : i32, i32
  }
  func.func @transform_4(%arg0: i32) -> (i32, i32) {
    %c0_i32 = arith.constant 0 : i32
    %c0_i32_0 = arith.constant 0 : i32
    return %c0_i32, %arg0 : i32, i32
  }
}

</mosaic_0001>

<llo_original>
// kernel: _head_impl.1
$region0: #{_head_impl.1}
  #allocation0 [shape = 'u32[]', space=smem, size = 0x4, offset = 0x4, fixed_abs, tag = 'smem constant byte address 0x4 - core index']
  #allocation1 [shape = 'u32[144,128]{1,0:T(1,128)}', space=vmem, size = 0x12000, scoped, tag = 'internal scratch']
  #allocation2 [shape = 'f32[1,1]{1,0:T(1,128)S(6)}', space=smem, size = 0x200, scoped, tag = 'scoped memory for _head_impl.1']
  %s0 = inlined_call_operand.hbm [shape: f32[8,1024], index: 0, kind: input, shape index: {}]
  %s1 = inlined_call_operand.hbm [shape: f32[8,1024], index: 1, kind: input, shape index: {}]
  %s2 = inlined_call_operand.vmem [shape: f32[1,1024], index: 2, kind: input, shape index: {}]
  %s3 = inlined_call_operand.<no memory space> [shape: f32[1,1], index: 3, kind: input, shape index: {}]
  %s4 = inlined_call_operand.hbm [shape: f32[1,8], index: 4, kind: output, shape index: {}]
  %s5 = sld [smem:[#allocation0]]
  $region34: #{_head_impl.1} parent=0
    _
  %s7 = ssub.s32 1, %s5
  %s8 = scalar_select 0, %s7, %s5
  %9 = sst [smem:[#allocation2]] %s3
  $region1: #{_head_impl.1} parent=0
    #allocation3 [shape = 'u8[32768]{0}', space=vmem, size = 0x8000, scoped, tag = 'input window, operand 0, single buffered']
    #allocation4 [shape = 's32[1]{0}', space=sflag, size = 0x4, scoped, tag = 'scoped memory for _head_impl.1']
    #allocation5 [shape = 's32[1]{0}', space=sflag, size = 0x4, scoped, tag = 'scoped memory for _head_impl.1']
    #allocation6 [shape = 'u8[32768]{0}', space=vmem, size = 0x8000, scoped, tag = 'input window, operand 1, single buffered']
    #allocation7 [shape = 's32[1]{0}', space=sflag, size = 0x4, scoped, tag = 'scoped memory for _head_impl.1']
    #allocation8 [shape = 'u8[512]{0}', space=vmem, size = 0x400, scoped, tag = 'output window, operand 0, single buffered']
    %10 = vsyncpa [#allocation4], 0
    %11 = vsyncpa [#allocation7], 0
    %12 = vsyncpa [#allocation5], 0
    // Predicated region
    $region2: #{_head_impl.1} parent=1 // pred_check
      _
    $region3: #{_head_impl.1} parent=1 // pred_check_branch
      %14 = sbr.rel (0) target = $region5
    $region4: #{_head_impl.1} parent=1 // pred_region
      %s16 = ssub.s32 1024, 1024
      %17 = vsyncadd [#allocation4], %s16
      %s19 = sshll.u32 [#allocation3], 4
      %s20 = int_to_ptr.vmem [resolvable:$true] %s19
      %22 = dma.hbm_to_vmem [thread:$0]  %s0, 1024, %s20, [#allocation4]
    $region5: #{_head_impl.1} parent=1 // pred_fallthru
      _
    // Predicated region
    $region6: #{_head_impl.1} parent=1 // pred_check
      _
    $region7: #{_head_impl.1} parent=1 // pred_check_branch
      %24 = sbr.rel (0) target = $region9
    $region8: #{_head_impl.1} parent=1 // pred_region
      %s26 = ssub.s32 1024, 1024
      %27 = vsyncadd [#allocation7], %s26
      %s29 = sshll.u32 [#allocation6], 4
      %s30 = int_to_ptr.vmem [resolvable:$true] %s29
      %32 = dma.hbm_to_vmem [thread:$0]  %s1, 1024, %s30, [#allocation7]
    $region9: #{_head_impl.1} parent=1 // pred_fallthru
      _
    // Predicated region
    $region10: #{_head_impl.1} parent=1 // pred_check
      _
    $region11: #{_head_impl.1} parent=1 // pred_check_branch
      %34 = sbr.rel (0) target = $region13
    $region12: #{_head_impl.1} parent=1 // pred_region
      _
    $region13: #{_head_impl.1} parent=1 // pred_fallthru
      _
    // Predicated region
    $region14: #{_head_impl.1} parent=1 // pred_check
      _
    $region15: #{_head_impl.1} parent=1 // pred_check_branch
      %36 = sbr.rel (0) target = $region17
    $region16: #{_head_impl.1} parent=1 // pred_region
      _
    $region17: #{_head_impl.1} parent=1 // pred_fallthru
      _
    // Predicated region
    $region18: #{_head_impl.1} parent=1 // pred_check
      _
    $region19: #{_head_impl.1} parent=1 // pred_check_branch
      %38 = sbr.rel (0) target = $region21
    $region20: #{_head_impl.1} parent=1 // pred_region
      %39 = dma.done [#allocation4], 1024
    $region21: #{_head_impl.1} parent=1 // pred_fallthru
      _
    // Predicated region
    $region22: #{_head_impl.1} parent=1 // pred_check
      _
    $region23: #{_head_impl.1} parent=1 // pred_check_branch
      %41 = sbr.rel (0) target = $region25
    $region24: #{_head_impl.1} parent=1 // pred_region
      %42 = dma.done [#allocation7], 1024
    $region25: #{_head_impl.1} parent=1 // pred_fallthru
      _
    %v43 = vld [vmem:[#allocation3] sm:$0xff]
    %v44 = vld [vmem:[#allocation3 + $0x8] sm:$0xff]
    %v45 = vld [vmem:[#allocation3 + $0x10] sm:$0xff]
    %v46 = vld [vmem:[#allocation3 + $0x18] sm:$0xff]
    %v47 = vld [vmem:[#allocation3 + $0x20] sm:$0xff]
    %v48 = vld [vmem:[#allocation3 + $0x28] sm:$0xff]
    %v49 = vld [vmem:[#allocation3 + $0x30] sm:$0xff]
    %v50 = vld [vmem:[#allocation3 + $0x38] sm:$0xff]
    %v51 = vld [vmem:[#allocation6] sm:$0xff]
    %v52 = vld [vmem:[#allocation6 + $0x8] sm:$0xff]
    %v53 = vld [vmem:[#allocation6 + $0x10] sm:$0xff]
    %v54 = vld [vmem:[#allocation6 + $0x18] sm:$0xff]
    %v55 = vld [vmem:[#allocation6 + $0x20] sm:$0xff]
    %v56 = vld [vmem:[#allocation6 + $0x28] sm:$0xff]
    %v57 = vld [vmem:[#allocation6 + $0x30] sm:$0xff]
    %v58 = vld [vmem:[#allocation6 + $0x38] sm:$0xff]
    %v59 = vsub.f32 %v43, %v51
    %v60 = vsub.f32 %v44, %v52
    %v61 = vsub.f32 %v45, %v53
    %v62 = vsub.f32 %v46, %v54
    %v63 = vsub.f32 %v47, %v55
    %v64 = vsub.f32 %v48, %v56
    %v65 = vsub.f32 %v49, %v57
    %v66 = vsub.f32 %v50, %v58
    %v67 = vand.u32 2147483647, %v59
    %v68 = vand.u32 2147483647, %v60
    %v69 = vand.u32 2147483647, %v61
    %v70 = vand.u32 2147483647, %v62
    %v71 = vand.u32 2147483647, %v63
    %v72 = vand.u32 2147483647, %v64
    %v73 = vand.u32 2147483647, %v65
    %v74 = vand.u32 2147483647, %v66
    %v75 = vld [vmem:[%s2] sm:$0xff]
    %s76 = sld [smem:[#allocation2]]
    %v77 = vstv %s76
    %v79 = vlaneseq
    %v80 = vshrl.u32 %v79, 7
    %v81 = vsub.s32 0, %v80
    %v82 = vrot.slane %v75, %v81
    %v83 = vlaneseq
    %v84 = vshrl.u32 %v83, 7
    %v85 = vsub.s32 1, %v84
    %v86 = vrot.slane %v75, %v85
    %v87 = vlaneseq
    %v88 = vshrl.u32 %v87, 7
    %v89 = vsub.s32 2, %v88
    %v90 = vrot.slane %v75, %v89
    %v91 = vlaneseq
    %v92 = vshrl.u32 %v91, 7
    %v93 = vsub.s32 3, %v92
    %v94 = vrot.slane %v75, %v93
    %v95 = vlaneseq
    %v96 = vshrl.u32 %v95, 7
    %v97 = vsub.s32 4, %v96
    %v98 = vrot.slane %v75, %v97
    %v99 = vlaneseq
    %v100 = vshrl.u32 %v99, 7
    %v101 = vsub.s32 5, %v100
    %v102 = vrot.slane %v75, %v101
    %v103 = vlaneseq
    %v104 = vshrl.u32 %v103, 7
    %v105 = vsub.s32 6, %v104
    %v106 = vrot.slane %v75, %v105
    %v107 = vlaneseq
    %v108 = vshrl.u32 %v107, 7
    %v109 = vsub.s32 7, %v108
    %v110 = vrot.slane %v75, %v109
    %119 = vmatprep.subr.mxu0 %v68
    %120 = vmatpush1.xpose.msra.mxu0 %v67
    %121 = vmatprep.subr.mxu0 0.0
    %122 = vmatpush1.xpose.msra.mxu0 0.0
    %123 = vmatprep.subr.mxu0 0.0
    %124 = vmatpush1.xpose.msra.mxu0 0.0
    %125 = vmatprep.subr.mxu0 0.0
    %126 = vmatpush1.xpose.msra.mxu0 0.0
    %127 = vmatprep.subr.mxu0 0.0
    %128 = vmatpush1.xpose.msra.mxu0 0.0
    %129 = vmatprep.subr.mxu0 0.0
    %130 = vmatpush1.xpose.msra.mxu0 0.0
    %131 = vmatprep.subr.mxu0 0.0
    %132 = vmatpush1.xpose.msra.mxu0 0.0
    %133 = vmatprep.subr.mxu0 0.0
    %134 = vmatpush1.xpose.msra.mxu0 0.0
    %135 = vmatprep.subr.mxu0 0.0
    %136 = vmatpush1.xpose.msra.mxu0 0.0
    %137 = vmatprep.subr.mxu0 0.0
    %138 = vmatpush1.xpose.msra.mxu0 0.0
    %139 = vmatprep.subr.mxu0 0.0
    %140 = vmatpush1.xpose.msra.mxu0 0.0
    %141 = vmatprep.subr.mxu0 0.0
    %142 = vmatpush1.xpose.msra.mxu0 0.0
    %143 = vmatprep.subr.mxu0 0.0
    %144 = vmatpush1.xpose.msra.mxu0 0.0
    %145 = vmatprep.subr.mxu0 0.0
    %146 = vmatpush1.xpose.msra.mxu0 0.0
    %147 = vmatprep.subr.mxu0 0.0
    %148 = vmatpush1.xpose.msra.mxu0 0.0
    %149 = vmatprep.subr.mxu0 0.0
    %150 = vmatpush1.xpose.msra.mxu0 0.0
    %151 = vmatprep.subr.mxu0 0.0
    %152 = vmatpush1.xpose.msra.mxu0 0.0
    %153 = vmatprep.subr.mxu0 0.0
    %154 = vmatpush1.xpose.msra.mxu0 0.0
    %155 = vmatprep.subr.mxu0 0.0
    %156 = vmatpush1.xpose.msra.mxu0 0.0
    %157 = vmatprep.subr.mxu0 0.0
    %158 = vmatpush1.xpose.msra.mxu0 0.0
    %159 = vmatprep.subr.mxu0 0.0
    %160 = vmatpush1.xpose.msra.mxu0 0.0
    %161 = vmatprep.subr.mxu0 0.0
    %162 = vmatpush1.xpose.msra.mxu0 0.0
    %163 = vmatprep.subr.mxu0 0.0
    %164 = vmatpush1.xpose.msra.mxu0 0.0
    %165 = vmatprep.subr.mxu0 0.0
    %166 = vmatpush1.xpose.msra.mxu0 0.0
    %167 = vmatprep.subr.mxu0 0.0
    %168 = vmatpush1.xpose.msra.mxu0 0.0
    %169 = vmatprep.subr.mxu0 0.0
    %170 = vmatpush1.xpose.msra.mxu0 0.0
    %171 = vmatprep.subr.mxu0 0.0
    %172 = vmatpush1.xpose.msra.mxu0 0.0
    %173 = vmatprep.subr.mxu0 0.0
    %174 = vmatpush1.xpose.msra.mxu0 0.0
    %175 = vmatprep.subr.mxu0 0.0
    %176 = vmatpush1.xpose.msra.mxu0 0.0
    %177 = vmatprep.subr.mxu0 0.0
    %178 = vmatpush1.xpose.msra.mxu0 0.0
    %179 = vmatprep.subr.mxu0 0.0
    %180 = vmatpush1.xpose.msra.mxu0 0.0
    %181 = vmatprep.subr.mxu0 0.0
    %182 = vmatpush1.xpose.msra.mxu0 0.0
    %183 = vmatprep.mubr.f32.mxu0 %v86
    %184 = vmatmul.mubr.f32.gmra.mrb[0].mxu0 %v82
    %v185 = vpop.f32.mrb[0].mxu0
    %v186 = vadd.f32 %v77, %v185
    %v187 = vpop.f32.mrb[0].mxu0
    %188 = vdwg.mxu0
    %189 = vmatprep.subr.mxu0 %v70
    %190 = vmatpush1.xpose.msra.mxu0 %v69
    %191 = vmatprep.subr.mxu0 0.0
    %192 = vmatpush1.xpose.msra.mxu0 0.0
    %193 = vmatprep.subr.mxu0 0.0
    %194 = vmatpush1.xpose.msra.mxu0 0.0
    %195 = vmatprep.subr.mxu0 0.0
    %196 = vmatpush1.xpose.msra.mxu0 0.0
    %197 = vmatprep.subr.mxu0 0.0
    %198 = vmatpush1.xpose.msra.mxu0 0.0
    %199 = vmatprep.subr.mxu0 0.0
    %200 = vmatpush1.xpose.msra.mxu0 0.0
    %201 = vmatprep.subr.mxu0 0.0
    %202 = vmatpush1.xpose.msra.mxu0 0.0
    %203 = vmatprep.subr.mxu0 0.0
    %204 = vmatpush1.xpose.msra.mxu0 0.0
    %205 = vmatprep.subr.mxu0 0.0
    %206 = vmatpush1.xpose.msra.mxu0 0.0
    %207 = vmatprep.subr.mxu0 0.0
    %208 = vmatpush1.xpose.msra.mxu0 0.0
    %209 = vmatprep.subr.mxu0 0.0
    %210 = vmatpush1.xpose.msra.mxu0 0.0
    %211 = vmatprep.subr.mxu0 0.0
    %212 = vmatpush1.xpose.msra.mxu0 0.0
    %213 = vmatprep.subr.mxu0 0.0
    %214 = vmatpush1.xpose.msra.mxu0 0.0
    %215 = vmatprep.subr.mxu0 0.0
    %216 = vmatpush1.xpose.msra.mxu0 0.0
    %217 = vmatprep.subr.mxu0 0.0
    %218 = vmatpush1.xpose.msra.mxu0 0.0
    %219 = vmatprep.subr.mxu0 0.0
    %220 = vmatpush1.xpose.msra.mxu0 0.0
    %221 = vmatprep.subr.mxu0 0.0
    %222 = vmatpush1.xpose.msra.mxu0 0.0
    %223 = vmatprep.subr.mxu0 0.0
    %224 = vmatpush1.xpose.msra.mxu0 0.0
    %225 = vmatprep.subr.mxu0 0.0
    %226 = vmatpush1.xpose.msra.mxu0 0.0
    %227 = vmatprep.subr.mxu0 0.0
    %228 = vmatpush1.xpose.msra.mxu0 0.0
    %229 = vmatprep.subr.mxu0 0.0
    %230 = vmatpush1.xpose.msra.mxu0 0.0
    %231 = vmatprep.subr.mxu0 0.0
    %232 = vmatpush1.xpose.msra.mxu0 0.0
    %233 = vmatprep.subr.mxu0 0.0
    %234 = vmatpush1.xpose.msra.mxu0 0.0
    %235 = vmatprep.subr.mxu0 0.0
    %236 = vmatpush1.xpose.msra.mxu0 0.0
    %237 = vmatprep.subr.mxu0 0.0
    %238 = vmatpush1.xpose.msra.mxu0 0.0
    %239 = vmatprep.subr.mxu0 0.0
    %240 = vmatpush1.xpose.msra.mxu0 0.0
    %241 = vmatprep.subr.mxu0 0.0
    %242 = vmatpush1.xpose.msra.mxu0 0.0
    %243 = vmatprep.subr.mxu0 0.0
    %244 = vmatpush1.xpose.msra.mxu0 0.0
    %245 = vmatprep.subr.mxu0 0.0
    %246 = vmatpush1.xpose.msra.mxu0 0.0
    %247 = vmatprep.subr.mxu0 0.0
    %248 = vmatpush1.xpose.msra.mxu0 0.0
    %249 = vmatprep.subr.mxu0 0.0
    %250 = vmatpush1.xpose.msra.mxu0 0.0
    %251 = vmatprep.subr.mxu0 0.0
    %252 = vmatpush1.xpose.msra.mxu0 0.0
    %253 = vmatprep.mubr.f32.mxu0 %v94
    %254 = vmatmul.mubr.f32.gmra.mrb[0].mxu0 %v90
    %v255 = vpop.f32.mrb[0].mxu0
    %v256 = vadd.f32 %v186, %v255
    %v257 = vpop.f32.mrb[0].mxu0
    %258 = vdwg.mxu0
    %259 = vmatprep.subr.mxu0 %v72
    %260 = vmatpush1.xpose.msra.mxu0 %v71
    %261 = vmatprep.subr.mxu0 0.0
    %262 = vmatpush1.xpose.msra.mxu0 0.0
    %263 = vmatprep.subr.mxu0 0.0
    %264 = vmatpush1.xpose.msra.mxu0 0.0
    %265 = vmatprep.subr.mxu0 0.0
    %266 = vmatpush1.xpose.msra.mxu0 0.0
    %267 = vmatprep.subr.mxu0 0.0
    %268 = vmatpush1.xpose.msra.mxu0 0.0
    %269 = vmatprep.subr.mxu0 0.0
    %270 = vmatpush1.xpose.msra.mxu0 0.0
    %271 = vmatprep.subr.mxu0 0.0
    %272 = vmatpush1.xpose.msra.mxu0 0.0
    %273 = vmatprep.subr.mxu0 0.0
    %274 = vmatpush1.xpose.msra.mxu0 0.0
    %275 = vmatprep.subr.mxu0 0.0
    %276 = vmatpush1.xpose.msra.mxu0 0.0
    %277 = vmatprep.subr.mxu0 0.0
    %278 = vmatpush1.xpose.msra.mxu0 0.0
    %279 = vmatprep.subr.mxu0 0.0
    %280 = vmatpush1.xpose.msra.mxu0 0.0
    %281 = vmatprep.subr.mxu0 0.0
    %282 = vmatpush1.xpose.msra.mxu0 0.0
    %283 = vmatprep.subr.mxu0 0.0
    %284 = vmatpush1.xpose.msra.mxu0 0.0
    %285 = vmatprep.subr.mxu0 0.0
    %286 = vmatpush1.xpose.msra.mxu0 0.0
    %287 = vmatprep.subr.mxu0 0.0
    %288 = vmatpush1.xpose.msra.mxu0 0.0
    %289 = vmatprep.subr.mxu0 0.0
    %290 = vmatpush1.xpose.msra.mxu0 0.0
    %291 = vmatprep.subr.mxu0 0.0
    %292 = vmatpush1.xpose.msra.mxu0 0.0
    %293 = vmatprep.subr.mxu0 0.0
    %294 = vmatpush1.xpose.msra.mxu0 0.0
    %295 = vmatprep.subr.mxu0 0.0
    %296 = vmatpush1.xpose.msra.mxu0 0.0
    %297 = vmatprep.subr.mxu0 0.0
    %298 = vmatpush1.xpose.msra.mxu0 0.0
    %299 = vmatprep.subr.mxu0 0.0
    %300 = vmatpush1.xpose.msra.mxu0 0.0
    %301 = vmatprep.subr.mxu0 0.0
    %302 = vmatpush1.xpose.msra.mxu0 0.0
    %303 = vmatprep.subr.mxu0 0.0
    %304 = vmatpush1.xpose.msra.mxu0 0.0
    %305 = vmatprep.subr.mxu0 0.0
    %306 = vmatpush1.xpose.msra.mxu0 0.0
    %307 = vmatprep.subr.mxu0 0.0
    %308 = vmatpush1.xpose.msra.mxu0 0.0
    %309 = vmatprep.subr.mxu0 0.0
    %310 = vmatpush1.xpose.msra.mxu0 0.0
    %311 = vmatprep.subr.mxu0 0.0
    %312 = vmatpush1.xpose.msra.mxu0 0.0
    %313 = vmatprep.subr.mxu0 0.0
    %314 = vmatpush1.xpose.msra.mxu0 0.0
    %315 = vmatprep.subr.mxu0 0.0
    %316 = vmatpush1.xpose.msra.mxu0 0.0
    %317 = vmatprep.subr.mxu0 0.0
    %318 = vmatpush1.xpose.msra.mxu0 0.0
    %319 = vmatprep.subr.mxu0 0.0
    %320 = vmatpush1.xpose.msra.mxu0 0.0
    %321 = vmatprep.subr.mxu0 0.0
    %322 = vmatpush1.xpose.msra.mxu0 0.0
    %323 = vmatprep.mubr.f32.mxu0 %v102
    %324 = vmatmul.mubr.f32.gmra.mrb[0].mxu0 %v98
    %v325 = vpop.f32.mrb[0].mxu0
    %v326 = vadd.f32 %v256, %v325
    %v327 = vpop.f32.mrb[0].mxu0
    %328 = vdwg.mxu0
    %329 = vmatprep.subr.mxu0 %v74
    %330 = vmatpush1.xpose.msra.mxu0 %v73
    %331 = vmatprep.subr.mxu0 0.0
    %332 = vmatpush1.xpose.msra.mxu0 0.0
    %333 = vmatprep.subr.mxu0 0.0
    %334 = vmatpush1.xpose.msra.mxu0 0.0
    %335 = vmatprep.subr.mxu0 0.0
    %336 = vmatpush1.xpose.msra.mxu0 0.0
    %337 = vmatprep.subr.mxu0 0.0
    %338 = vmatpush1.xpose.msra.mxu0 0.0
    %339 = vmatprep.subr.mxu0 0.0
    %340 = vmatpush1.xpose.msra.mxu0 0.0
    %341 = vmatprep.subr.mxu0 0.0
    %342 = vmatpush1.xpose.msra.mxu0 0.0
    %343 = vmatprep.subr.mxu0 0.0
    %344 = vmatpush1.xpose.msra.mxu0 0.0
    %345 = vmatprep.subr.mxu0 0.0
    %346 = vmatpush1.xpose.msra.mxu0 0.0
    %347 = vmatprep.subr.mxu0 0.0
    %348 = vmatpush1.xpose.msra.mxu0 0.0
    %349 = vmatprep.subr.mxu0 0.0
    %350 = vmatpush1.xpose.msra.mxu0 0.0
    %351 = vmatprep.subr.mxu0 0.0
    %352 = vmatpush1.xpose.msra.mxu0 0.0
    %353 = vmatprep.subr.mxu0 0.0
    %354 = vmatpush1.xpose.msra.mxu0 0.0
    %355 = vmatprep.subr.mxu0 0.0
    %356 = vmatpush1.xpose.msra.mxu0 0.0
    %357 = vmatprep.subr.mxu0 0.0
    %358 = vmatpush1.xpose.msra.mxu0 0.0
    %359 = vmatprep.subr.mxu0 0.0
    %360 = vmatpush1.xpose.msra.mxu0 0.0
    %361 = vmatprep.subr.mxu0 0.0
    %362 = vmatpush1.xpose.msra.mxu0 0.0
    %363 = vmatprep.subr.mxu0 0.0
    %364 = vmatpush1.xpose.msra.mxu0 0.0
    %365 = vmatprep.subr.mxu0 0.0
    %366 = vmatpush1.xpose.msra.mxu0 0.0
    %367 = vmatprep.subr.mxu0 0.0
    %368 = vmatpush1.xpose.msra.mxu0 0.0
    %369 = vmatprep.subr.mxu0 0.0
    %370 = vmatpush1.xpose.msra.mxu0 0.0
    %371 = vmatprep.subr.mxu0 0.0
    %372 = vmatpush1.xpose.msra.mxu0 0.0
    %373 = vmatprep.subr.mxu0 0.0
    %374 = vmatpush1.xpose.msra.mxu0 0.0
    %375 = vmatprep.subr.mxu0 0.0
    %376 = vmatpush1.xpose.msra.mxu0 0.0
    %377 = vmatprep.subr.mxu0 0.0
    %378 = vmatpush1.xpose.msra.mxu0 0.0
    %379 = vmatprep.subr.mxu0 0.0
    %380 = vmatpush1.xpose.msra.mxu0 0.0
    %381 = vmatprep.subr.mxu0 0.0
    %382 = vmatpush1.xpose.msra.mxu0 0.0
    %383 = vmatprep.subr.mxu0 0.0
    %384 = vmatpush1.xpose.msra.mxu0 0.0
    %385 = vmatprep.subr.mxu0 0.0
    %386 = vmatpush1.xpose.msra.mxu0 0.0
    %387 = vmatprep.subr.mxu0 0.0
    %388 = vmatpush1.xpose.msra.mxu0 0.0
    %389 = vmatprep.subr.mxu0 0.0
    %390 = vmatpush1.xpose.msra.mxu0 0.0
    %391 = vmatprep.subr.mxu0 0.0
    %392 = vmatpush1.xpose.msra.mxu0 0.0
    %393 = vmatprep.mubr.f32.mxu0 %v110
    %394 = vmatmul.mubr.f32.gmra.mrb[0].mxu0 %v106
    %v395 = vpop.f32.mrb[0].mxu0
    %v396 = vadd.f32 %v326, %v395
    %v397 = vpop.f32.mrb[0].mxu0
    %398 = vdwg.mxu0
    %v399 = vxor.u32 %v396, 2147483648
    %v400 = vmul.f32 %v399, 1.442695
    %v401 = vpow.pop %v400
    %v402 = vadd.f32 %v401, 1.0
    %v403 = vrcp.pop %v402
    %v404 = vmul.f32 1.0, %v403
    %vm405 = vcmask 57344
    %406 = vst.msk [vmem:[#allocation8] sm:$0x1] %vm405, %v404
    // Predicated region
    $region26: #{_head_impl.1} parent=1 // pred_check
      _
    $region27: #{_head_impl.1} parent=1 // pred_check_branch
      %408 = sbr.rel (0) target = $region29
    $region28: #{_head_impl.1} parent=1 // pred_region
      %s410 = ssub.s32 16, 16
      %411 = vsyncadd [#allocation5], %s410
      %s413 = sshll.u32 [#allocation8], 4
      %s414 = int_to_ptr.vmem [resolvable:$true] %s413
      %416 = dma.vmem_to_hbm [thread:$0]  %s414, 16, %s4, [#allocation5]
    $region29: #{_head_impl.1} parent=1 // pred_fallthru
      _
    // Predicated region
    $region30: #{_head_impl.1} parent=1 // pred_check
      _
    $region31: #{_head_impl.1} parent=1 // pred_check_branch
      %418 = sbr.rel (0) target = $region33
    $region32: #{_head_impl.1} parent=1 // pred_region
      %419 = dma.done [#allocation5], 16
    $region33: #{_head_impl.1} parent=1 // pred_fallthru
      _
    %420 = vsyncpa [#allocation4], 1
    %421 = vsyncpa [#allocation7], 1
    %422 = vsyncpa [#allocation5], 1

</llo_original>
